<compile_context>
chip_gen: v7x
topology: tpu7x:2x2x1
jax: 0.10.0
libtpu: 0.0.40
codegen_flags: <defaults>
</compile_context>

<pallas_src>
import functools

import jax
import jax.numpy as jnp
from jax.experimental import pallas as pl
from jax.experimental.pallas import tpu as pltpu


def _round_up(x, m):
    return ((x + m - 1) // m) * m


def _vq_kernel(z_ref, en_ref, embt_ref, zq_ref, idx_ref, err_ref, *,
               n_embed, s_actual, mask_cols):
    num_chunks, k_chunk, _ = en_ref.shape      # en_ref: (num_chunks, k_chunk, c)
    c, tile_n = z_ref.shape                    # z block: (c, tile_n)
    n_embed_padded = num_chunks * k_chunk
    mask_rows = n_embed_padded != n_embed
    gather_dtype = embt_ref.dtype

    z_native = z_ref[...]                      # native dtype, loaded once
    z_cross = z_native.astype(en_ref.dtype)    # only cast if cross dtype differs

    def compute_chunk(k):
        # (k_chunk, c) @ (c, tile_n) -> (k_chunk, tile_n) ranking scores
        en_chunk = en_ref[k]
        cross = jnp.dot(en_chunk, z_cross, preferred_element_type=jnp.float32)
        row = jax.lax.broadcasted_iota(jnp.int32, (k_chunk, tile_n), 0)
        if mask_rows:
            cross = jnp.where(k * k_chunk + row < n_embed, cross,
                              jnp.float32(-3e38))
        cmax = jnp.max(cross, axis=0, keepdims=True)                 # (1, tile_n)
        # first-occurrence argmax inside the chunk (matches torch.argmin ties)
        cidx = jnp.min(jnp.where(cross == cmax, row, k_chunk),
                       axis=0, keepdims=True)                        # (1, tile_n)
        onehot = (row == cidx).astype(gather_dtype)                  # (k_chunk, tile_n)
        # codebook gather with ORIGINAL (un-normalized) embedding via MXU
        zq_chunk = jnp.dot(embt_ref[k], onehot,
                           preferred_element_type=jnp.float32)       # (c, tile_n)
        return cmax, (cidx + k * k_chunk).astype(jnp.int32), zq_chunk

    if num_chunks == 1:
        _, best_idx, best_zq = compute_chunk(0)
    else:
        def body(k, carry):
            run_max, run_idx, run_zq = carry
            cmax, cidx, zq_chunk = compute_chunk(k)
            # strict '>' keeps the earlier chunk on ties -> global first occurrence
            better = cmax > run_max
            return (jnp.where(better, cmax, run_max),
                    jnp.where(better, cidx, run_idx),
                    jnp.where(better, zq_chunk, run_zq))

        init = (jnp.full((1, tile_n), -jnp.inf, dtype=jnp.float32),
                jnp.zeros((1, tile_n), dtype=jnp.int32),
                jnp.zeros((c, tile_n), dtype=jnp.float32))
        _, best_idx, best_zq = jax.lax.fori_loop(
            0, num_chunks, body, init, unroll=(num_chunks <= 4))

    zq_ref[...] = best_zq.astype(zq_ref.dtype)
    idx_ref[...] = best_idx

    # per-position squared error, reduced over channels then folded to a single
    # 128-lane partial per tile (final scalar reduction happens in the wrapper,
    # so both grid axes stay fully parallel).
    z_f32 = z_native.astype(jnp.float32)
    diff = best_zq - z_f32
    err = jnp.sum(diff * diff, axis=0, keepdims=True)                # (1, tile_n)
    if mask_cols:
        col = pl.program_id(1) * tile_n + jax.lax.broadcasted_iota(
            jnp.int32, (1, tile_n), 1)
        err = jnp.where(col < s_actual, err, 0.0)
    err128 = err[:, 0:128]
    for j in range(1, tile_n // 128):                                # static, <= 16 adds
        err128 = err128 + err[:, j * 128:(j + 1) * 128]
    err_ref[...] = err128


def _pick_tile_n(S, c, n_embed_padded, k_chunk, z_bytes, cross_bytes,
                 gather_bytes, b, vmem_budget, min_programs, max_tile):
    budget = int(0.75 * vmem_budget)
    # resident codebook operands (Pallas double-buffers them by default)
    resident = 2 * n_embed_padded * c * (cross_bytes + gather_bytes)
    upper = max(128, min(max_tile, _round_up(S, 128)))
    tile_n = 128
    for t in range(upper, 127, -128):
        # double-buffered z in + zq out + idx out, plus the tiny err partial
        io = 2 * t * (2 * c * z_bytes + 4) + 2 * 128 * 4
        # in-kernel chunk intermediates (cross f32 + iota + onehot) + running zq/z/diff
        interm = k_chunk * t * 12 + 4 * c * t * 4
        if resident + io + interm > budget:
            continue
        if t > 128 and b * ((S + t - 1) // t) < min_programs:
            continue            # keep both TensorCores busy on v7x
        tile_n = t
        break
    return tile_n


def vector_quantizer_forward(z, embedding, *, beta=0.25, max_tile=1024,
                             cross_dtype=jnp.bfloat16, vmem_budget_bytes=None):
    """z: (b, c, d, h, w) with c == embed_dim; embedding: (n_embed, embed_dim).

    cross_dtype=bf16 is the default for the ranking matmul (it only needs code
    ordering); pass jnp.float32 if bit-parity with the torch argmin on near
    ties is required.
    """
    b, c, dd, hh, ww = z.shape
    n_embed, embed_dim = embedding.shape
    assert c == embed_dim

    S = dd * hh * ww
    z_dtype = z.dtype
    # bf16 gather only when the output itself is bf16 (keeps f32 outputs as
    # bit-exact copies of the codebook rows).
    gather_dtype = jnp.bfloat16 if z_dtype == jnp.bfloat16 else jnp.float32

    # --- device-aware defaults (VMEM budget, megacore occupancy) --------------
    kind = ""
    try:
        kind = jax.devices()[0].device_kind.lower()
    except Exception:
        pass
    is_v7 = ("v7" in kind) or ("7x" in kind)
    if vmem_budget_bytes is None:
        # v7x: 64 MiB physical VMEM -> stay at 40 MiB; v5e/v6e: 128 MiB -> 80 MiB.
        vmem_budget_bytes = (40 if is_v7 else 80) * 1024 * 1024
    min_programs = 2 if is_v7 else 1

    # --- codebook preprocessing (hoisted out of the hot loop) -----------------
    k_chunk = min(512, _round_up(n_embed, 8))
    n_embed_padded = _round_up(n_embed, k_chunk)
    num_chunks = n_embed_padded // k_chunk

    emb_f32 = embedding.astype(jnp.float32)
    en = emb_f32 / jnp.maximum(
        jnp.sqrt(jnp.sum(emb_f32 * emb_f32, axis=1, keepdims=True)), 1e-12)
    pad_rows = n_embed_padded - n_embed
    if pad_rows:
        en = jnp.pad(en, ((0, pad_rows), (0, 0)))
        emb_f32 = jnp.pad(emb_f32, ((0, pad_rows), (0, 0)))
    en3 = en.reshape(num_chunks, k_chunk, c).astype(cross_dtype)
    embt3 = jnp.transpose(emb_f32.reshape(num_chunks, k_chunk, c),
                          (0, 2, 1)).astype(gather_dtype)
    # TODO(synk): single-buffer the resident codebook operands with
    #   pipeline_mode=pl.Buffered(1) once verified on the target jax version,
    #   and stream codebook chunks from HBM when the resident footprint alone
    #   exceeds the VMEM budget (huge n_embed * c).

    # --- spatial tiling (VMEM-budget + occupancy aware, padded last tile) -----
    z_bytes = jnp.dtype(z_dtype).itemsize
    cross_bytes = jnp.dtype(cross_dtype).itemsize
    gather_bytes = jnp.dtype(gather_dtype).itemsize
    tile_n = _pick_tile_n(S, c, n_embed_padded, k_chunk, z_bytes, cross_bytes,
                          gather_bytes, b, vmem_budget_bytes, min_programs,
                          max_tile)
    n_tiles = (S + tile_n - 1) // tile_n
    S_pad = n_tiles * tile_n
    mask_cols = S_pad != S

    z_flat = z.reshape(b, c, S)                     # free reshape, no permute
    if mask_cols:
        z_flat = jnp.pad(z_flat, ((0, 0), (0, 0), (0, S_pad - S)))

    kernel = functools.partial(_vq_kernel, n_embed=n_embed, s_actual=S,
                               mask_cols=mask_cols)

    grid = (b, n_tiles)
    zq_flat, idx_flat, err_part = pl.pallas_call(
        kernel,
        out_shape=(
            jax.ShapeDtypeStruct((b, c, S_pad), z_dtype),
            jax.ShapeDtypeStruct((b, 1, S_pad), jnp.int32),
            jax.ShapeDtypeStruct((b, 1, n_tiles * 128), jnp.float32),
        ),
        grid=grid,
        in_specs=[
            pl.BlockSpec((None, c, tile_n), lambda bi, ti: (bi, 0, ti)),
            pl.BlockSpec((num_chunks, k_chunk, c), lambda bi, ti: (0, 0, 0)),
            pl.BlockSpec((num_chunks, c, k_chunk), lambda bi, ti: (0, 0, 0)),
        ],
        out_specs=(
            pl.BlockSpec((None, c, tile_n), lambda bi, ti: (bi, 0, ti)),
            pl.BlockSpec((None, 1, tile_n), lambda bi, ti: (bi, 0, ti)),
            pl.BlockSpec((None, 1, 128), lambda bi, ti: (bi, 0, ti)),
        ),
        compiler_params=pltpu.CompilerParams(
            dimension_semantics=("parallel", "parallel"),
            vmem_limit_bytes=int(vmem_budget_bytes),
        ),
    )(z_flat, en3, embt3)

    # legacy loss forward value: beta*mean((zq-z)^2) + mean((zq-z)^2)
    loss = (1.0 + float(beta)) * jnp.sum(err_part) / float(b * S * c)

    # straight_through=True: forward value of z + (z_q - z).detach() is z_q.
    z_q = zq_flat[:, :, :S].reshape(b, c, dd, hh, ww)
    encoding_indices = idx_flat[:, 0, :S].reshape(b, dd, hh, ww)
    return z_q, loss, encoding_indices


if __name__ == "__main__":
    n_embed, embed_dim = 64, 16
    b, d, h, w = 2, 4, 8, 8          # S = d*h*w = 256 spatial positions per batch

    key = jax.random.PRNGKey(0)
    kz, ke = jax.random.split(key)
    z = jax.random.normal(kz, (b, embed_dim, d, h, w), dtype=jnp.float32)
    # nn.Embedding init: uniform(-1/n_embed, 1/n_embed)
    embedding = jax.random.uniform(
        ke, (n_embed, embed_dim), dtype=jnp.float32,
        minval=-1.0 / n_embed, maxval=1.0 / n_embed)

    # exact-ranking path (f32 cross matmul) for bit-parity with the reference
    z_q, loss, indices = vector_quantizer_forward(
        z, embedding, beta=0.25, cross_dtype=jnp.float32)
    jax.block_until_ready((z_q, loss, indices))

    assert z_q.shape == (b, embed_dim, d, h, w)
    assert indices.shape == (b, d, h, w)
    assert loss.shape == ()

    # pure-JAX reference mirroring the torch module's forward values
    zc = jnp.transpose(z, (0, 2, 3, 4, 1)).reshape(-1, embed_dim)
    zn = zc / jnp.maximum(jnp.sqrt(jnp.sum(zc * zc, axis=1, keepdims=True)), 1e-12)
    en = embedding / jnp.maximum(
        jnp.sqrt(jnp.sum(embedding * embedding, axis=1, keepdims=True)), 1e-12)
    cross = jnp.einsum('bd,nd->bn', zn, en, precision=jax.lax.Precision.HIGHEST)
    dmat = (jnp.sum(zn * zn, axis=1, keepdims=True)
            + jnp.sum(en * en, axis=1)[None, :] - 2.0 * cross)
    ref_idx = jnp.argmin(dmat, axis=1).reshape(b, d, h, w).astype(jnp.int32)
    ref_zq = jnp.transpose(
        embedding[ref_idx.reshape(-1)].reshape(b, d, h, w, embed_dim),
        (0, 4, 1, 2, 3))
    ref_loss = (1.0 + 0.25) * jnp.mean((ref_zq - z) ** 2)

    assert jnp.array_equal(indices, ref_idx)
    assert jnp.allclose(z_q, ref_zq, atol=1e-6)
    assert jnp.allclose(loss, ref_loss, rtol=1e-5, atol=1e-7)

    # default fast path (bf16 ranking matmul): exercise it, check sanity only
    # (bf16 may legitimately flip a rare near-tie vs the f32 reference).
    z_q_b, loss_b, idx_b = vector_quantizer_forward(z, embedding, beta=0.25)
    jax.block_until_ready((z_q_b, loss_b, idx_b))
    assert z_q_b.shape == z_q.shape and idx_b.shape == indices.shape
    assert bool(jnp.isfinite(loss_b))
    assert bool(jnp.all((idx_b >= 0) & (idx_b < n_embed)))

    print("KERNEL_OK")
</pallas_src>

<mosaic_0001>
module attributes {stable_mosaic.version = 11 : i64} {
  func.func @_vq_kernel(%arg0: i32, %arg1: i32, %arg2: memref<1x16x256xf32, #tpu.memory_space<vmem>>, %arg3: memref<1x64x16xf32, #tpu.memory_space<vmem>>, %arg4: memref<1x16x64xf32, #tpu.memory_space<vmem>>, %arg5: memref<1x16x256xf32, #tpu.memory_space<vmem>>, %arg6: memref<1x1x256xi32, #tpu.memory_space<vmem>>, %arg7: memref<1x1x128xf32, #tpu.memory_space<vmem>>) attributes {dimension_semantics = [#tpu.dimension_semantics<parallel>, #tpu.dimension_semantics<parallel>], iteration_bounds = array<i64: 2, 1>, scalar_prefetch = 0 : i64, scratch_operands = 0 : i64, tpu.core_type = #tpu.core_type<tc>, window_params = [{transform_indices = @transform_0, window_bounds = array<i64: 1, 16, 256>}, {pipeline_mode = #tpu.pipeline_mode<synchronous>, transform_indices = @transform_1, window_bounds = array<i64: 1, 64, 16>}, {pipeline_mode = #tpu.pipeline_mode<synchronous>, transform_indices = @transform_2, window_bounds = array<i64: 1, 16, 64>}, {transform_indices = @transform_3, window_bounds = array<i64: 1, 16, 256>}, {transform_indices = @transform_4, window_bounds = array<i64: 1, 1, 256>}, {transform_indices = @transform_5, window_bounds = array<i64: 1, 1, 128>}]} {
    %c0 = arith.constant 0 : index
    %c0_0 = arith.constant 0 : index
    %c0_1 = arith.constant 0 : index
    %0 = vector.load %arg2[%c0, %c0_0, %c0_1] : memref<1x16x256xf32, #tpu.memory_space<vmem>>, vector<1x16x256xf32>
    %1 = vector.shape_cast %0 : vector<1x16x256xf32> to vector<16x256xf32>
    %c0_2 = arith.constant 0 : index
    %c0_3 = arith.constant 0 : index
    %c0_4 = arith.constant 0 : index
    %2 = vector.load %arg3[%c0_2, %c0_3, %c0_4] : memref<1x64x16xf32, #tpu.memory_space<vmem>>, vector<1x64x16xf32>
    %3 = vector.shape_cast %2 : vector<1x64x16xf32> to vector<64x16xf32>
    %cst = arith.constant dense<0.000000e+00> : vector<64x256xf32>
    %4 = tpu.matmul %3, %1, %cst {dimension_numbers = #tpu.dot_dimension_numbers<[1], [0], [0], [1], [0, 0, 1, 1], [], []>} : vector<64x16xf32>, vector<16x256xf32>, vector<64x256xf32> -> vector<64x256xf32>
    %5 = tpu.iota {dimensions = array<i32: 0>} : vector<64x256xi32>
    %cst_5 = arith.constant dense<0xFF800000> : vector<256xf32>
    %6 = vector.multi_reduction <maximumf>, %4, %cst_5 [0] : vector<64x256xf32> to vector<256xf32>
    %7 = vector.shape_cast %6 : vector<256xf32> to vector<1x256xf32>
    %8 = vector.broadcast %7 : vector<1x256xf32> to vector<64x256xf32>
    %9 = arith.cmpf oeq, %4, %8 : vector<64x256xf32>
    %c64_i32 = arith.constant 64 : i32
    %10 = vector.broadcast %c64_i32 : i32 to vector<64x256xi32>
    %11 = arith.select %9, %5, %10 : vector<64x256xi1>, vector<64x256xi32>
    %cst_6 = arith.constant dense<2147483647> : vector<256xi32>
    %12 = vector.multi_reduction <minsi>, %11, %cst_6 [0] : vector<64x256xi32> to vector<256xi32>
    %13 = vector.shape_cast %12 : vector<256xi32> to vector<1x256xi32>
    %14 = vector.broadcast %13 : vector<1x256xi32> to vector<64x256xi32>
    %15 = arith.cmpi eq, %5, %14 : vector<64x256xi32>
    %16 = arith.extui %15 : vector<64x256xi1> to vector<64x256xi32>
    %17 = arith.sitofp %16 : vector<64x256xi32> to vector<64x256xf32>
    %c0_7 = arith.constant 0 : index
    %c0_8 = arith.constant 0 : index
    %c0_9 = arith.constant 0 : index
    %18 = vector.load %arg4[%c0_7, %c0_8, %c0_9] : memref<1x16x64xf32, #tpu.memory_space<vmem>>, vector<1x16x64xf32>
    %19 = vector.shape_cast %18 : vector<1x16x64xf32> to vector<16x64xf32>
    %cst_10 = arith.constant dense<0.000000e+00> : vector<16x256xf32>
    %20 = tpu.matmul %19, %17, %cst_10 {dimension_numbers = #tpu.dot_dimension_numbers<[1], [0], [0], [1], [0, 0, 1, 1], [], []>} : vector<16x64xf32>, vector<64x256xf32>, vector<16x256xf32> -> vector<16x256xf32>
    %c0_i32 = arith.constant 0 : i32
    %21 = vector.broadcast %c0_i32 : i32 to vector<1x256xi32>
    %22 = arith.addi %13, %21 : vector<1x256xi32>
    %c0_11 = arith.constant 0 : index
    %c0_12 = arith.constant 0 : index
    %c0_13 = arith.constant 0 : index
    %23 = vector.load %arg5[%c0_11, %c0_12, %c0_13] : memref<1x16x256xf32, #tpu.memory_space<vmem>>, vector<1x16x256xf32>
    %24 = vector.shape_cast %23 : vector<1x16x256xf32> to vector<16x256xf32>
    %25 = vector.shape_cast %20 : vector<16x256xf32> to vector<1x16x256xf32>
    tpu.vector_store %arg5[%c0_11, %c0_12, %c0_13], %25 {strides = array<i32>} : memref<1x16x256xf32, #tpu.memory_space<vmem>>, vector<1x16x256xf32>,
    %c0_14 = arith.constant 0 : index
    %c0_15 = arith.constant 0 : index
    %c0_16 = arith.constant 0 : index
    %26 = vector.load %arg6[%c0_14, %c0_15, %c0_16] : memref<1x1x256xi32, #tpu.memory_space<vmem>>, vector<1x1x256xi32>
    %27 = vector.shape_cast %26 : vector<1x1x256xi32> to vector<1x256xi32>
    %28 = vector.shape_cast %22 : vector<1x256xi32> to vector<1x1x256xi32>
    tpu.vector_store %arg6[%c0_14, %c0_15, %c0_16], %28 {strides = array<i32>} : memref<1x1x256xi32, #tpu.memory_space<vmem>>, vector<1x1x256xi32>,
    %29 = arith.subf %20, %1 : vector<16x256xf32>
    %30 = arith.mulf %29, %29 : vector<16x256xf32>
    %cst_17 = arith.constant dense<0.000000e+00> : vector<256xf32>
    %31 = vector.multi_reduction <add>, %30, %cst_17 [0] : vector<16x256xf32> to vector<256xf32>
    %32 = vector.shape_cast %31 : vector<256xf32> to vector<1x256xf32>
    %33 = vector.extract_strided_slice %32 {offsets = [0, 0], sizes = [1, 128], strides = [1, 1]} : vector<1x256xf32> to vector<1x128xf32>
    %34 = vector.extract_strided_slice %32 {offsets = [0, 128], sizes = [1, 128], strides = [1, 1]} : vector<1x256xf32> to vector<1x128xf32>
    %35 = arith.addf %33, %34 : vector<1x128xf32>
    %c0_18 = arith.constant 0 : index
    %c0_19 = arith.constant 0 : index
    %c0_20 = arith.constant 0 : index
    %36 = vector.load %arg7[%c0_18, %c0_19, %c0_20] : memref<1x1x128xf32, #tpu.memory_space<vmem>>, vector<1x1x128xf32>
    %37 = vector.shape_cast %36 : vector<1x1x128xf32> to vector<1x128xf32>
    %38 = vector.shape_cast %35 : vector<1x128xf32> to vector<1x1x128xf32>
    tpu.vector_store %arg7[%c0_18, %c0_19, %c0_20], %38 {strides = array<i32>} : memref<1x1x128xf32, #tpu.memory_space<vmem>>, vector<1x1x128xf32>,
    return
  }
  func.func @transform_0(%arg0: i32, %arg1: i32) -> (i32, i32, i32) {
    %c0_i32 = arith.constant 0 : i32
    %c0_i32_0 = arith.constant 0 : i32
    return %arg0, %c0_i32, %arg1 : i32, i32, i32
  }
  func.func @transform_1(%arg0: i32, %arg1: i32) -> (i32, i32, i32) {
    %c0_i32 = arith.constant 0 : i32
    %c0_i32_0 = arith.constant 0 : i32
    %c0_i32_1 = arith.constant 0 : i32
    %c0_i32_2 = arith.constant 0 : i32
    return %c0_i32, %c0_i32_0, %c0_i32_1 : i32, i32, i32
  }
  func.func @transform_2(%arg0: i32, %arg1: i32) -> (i32, i32, i32) {
    %c0_i32 = arith.constant 0 : i32
    %c0_i32_0 = arith.constant 0 : i32
    %c0_i32_1 = arith.constant 0 : i32
    %c0_i32_2 = arith.constant 0 : i32
    return %c0_i32, %c0_i32_0, %c0_i32_1 : i32, i32, i32
  }
  func.func @transform_3(%arg0: i32, %arg1: i32) -> (i32, i32, i32) {
    %c0_i32 = arith.constant 0 : i32
    %c0_i32_0 = arith.constant 0 : i32
    return %arg0, %c0_i32, %arg1 : i32, i32, i32
  }
  func.func @transform_4(%arg0: i32, %arg1: i32) -> (i32, i32, i32) {
    %c0_i32 = arith.constant 0 : i32
    %c0_i32_0 = arith.constant 0 : i32
    return %arg0, %c0_i32, %arg1 : i32, i32, i32
  }
  func.func @transform_5(%arg0: i32, %arg1: i32) -> (i32, i32, i32) {
    %c0_i32 = arith.constant 0 : i32
    %c0_i32_0 = arith.constant 0 : i32
    return %arg0, %c0_i32, %arg1 : i32, i32, i32
  }
}

</mosaic_0001>

<llo_original>
// kernel: tpu_custom_call.1
$region0: #{tpu_custom_call.1}
  #allocation0 [shape = 'u32[]', space=smem, size = 0x4, offset = 0x4, fixed_abs, tag = 'smem constant byte address 0x4 - core index']
  #allocation1 [shape = 'u32[144,128]{1,0:T(1,128)}', space=vmem, size = 0x12000, scoped, tag = 'internal scratch']
  %s0 = inlined_call_operand.hbm [shape: f32[2,16,256], index: 0, kind: input, shape index: {}]
  %s1 = inlined_call_operand.hbm [shape: f32[1,64,16], index: 1, kind: input, shape index: {}]
  %s2 = inlined_call_operand.hbm [shape: f32[1,16,64], index: 2, kind: input, shape index: {}]
  %s3 = inlined_call_operand.hbm [shape: f32[2,16,256], index: 3, kind: output, shape index: {0}]
  %s4 = inlined_call_operand.hbm [shape: s32[2,1,256], index: 4, kind: output, shape index: {1}]
  %s5 = inlined_call_operand.hbm [shape: f32[2,1,128], index: 5, kind: output, shape index: {2}]
  %6 = xla_tuple %s3, %s4, %s5
  %s7 = sld [smem:[#allocation0]]
  $region73: #{tpu_custom_call.1} parent=0
    _
  %s9 = ssub.s32 1, %s7
  %s10 = scalar_select 0, %s9, %s7
  $region1: #{tpu_custom_call.1} parent=0
    #allocation2 [shape = 'u8[32768]{0}', space=vmem, size = 0x8000, scoped, tag = 'input window, operand 0']
    #allocation3 [shape = 's32[2]{0}', space=sflag, size = 0x8, scoped, tag = 'scoped memory for tpu_custom_call.1']
    #allocation4 [shape = 's32[2]{0}', space=sflag, size = 0x8, scoped, tag = 'scoped memory for tpu_custom_call.1']
    #allocation5 [shape = 'u8[32768]{0}', space=vmem, size = 0x8000, scoped, tag = 'input window, operand 1, single buffered']
    #allocation6 [shape = 's32[1]{0}', space=sflag, size = 0x4, scoped, tag = 'scoped memory for tpu_custom_call.1']
    #allocation7 [shape = 'u8[8192]{0}', space=vmem, size = 0x2000, scoped, tag = 'input window, operand 2, single buffered']
    #allocation8 [shape = 'u8[32768]{0}', space=vmem, size = 0x8000, scoped, tag = 'output window, operand 0']
    #allocation9 [shape = 'u8[2048]{0}', space=vmem, size = 0x800, scoped, tag = 'output window, operand 1']
    #allocation10 [shape = 's32[2]{0}', space=sflag, size = 0x8, scoped, tag = 'scoped memory for tpu_custom_call.1']
    #allocation11 [shape = 'u8[1024]{0}', space=vmem, size = 0x400, scoped, tag = 'output window, operand 2']
    %11 = vsyncpa [#allocation3], 0
    %s12 = scalar_lea.sflag [#allocation3], 1
    %13 = vsyncpa %s12, 0
    %14 = vsyncpa [#allocation6], 0
    %15 = vsyncpa [#allocation4], 0
    %s16 = scalar_lea.sflag [#allocation4], 1
    %17 = vsyncpa %s16, 0
    %18 = vsyncpa [#allocation10], 0
    %s19 = scalar_lea.sflag [#allocation10], 1
    %20 = vsyncpa %s19, 0
    loop: start=0, step=1, limit=4
    $region2: #{tpu_custom_call.1} parent=1 // loop_pre_header
      _
    $region3: #{tpu_custom_call.1} parent=1 // loop_header
      %s22 = sphi 0, %s26
      %p23 = scmp.ge.s32.totalorder %s22, 4
      %s29 = sphi 0, %s41
      %s30 = sphi 0, %s37
      %s31 = sphi 0, %s29
      %s32 = sphi 0, %s30
      %s33 = sphi 0, %s31
      %s34 = sphi 0, %s32
      %s46 = sphi 0, %s48
      %s49 = sphi 0, %s46
      %s50 = sphi 0, %s49
      %s66 = sphi 0, %s50
      %s70 = sphi 0, %s70
      %s72 = sphi 0, %s70
      %s73 = sphi 0, %s72
      %s87 = sphi 0, %s73
      %s91 = sphi 0, %s91
      %s93 = sphi 0, %s91
      %s94 = sphi 0, %s93
      %s108 = sphi 0, %s94
      %s116 = sphi 0, %s118
      %s119 = sphi 0, %s116
      %s120 = sphi 0, %s119
      %s136 = sphi 0, %s120
      %s144 = sphi 0, %s146
      %s147 = sphi 0, %s144
      %s148 = sphi 0, %s147
      %s164 = sphi 0, %s148
      %s172 = sphi 0, %s174
      %s175 = sphi 0, %s172
      %s176 = sphi 0, %s175
      %s192 = sphi 0, %s176
    $region4: #{tpu_custom_call.1} parent=1 // loop_header_branch
      %25 = sbr.rel (%p23) target = $region8
    $region5: #{tpu_custom_call.1} parent=1 // loop_body
      %s27 = ssub.s32 %s22, 1
      %s28 = ssub.s32 %s22, 2
      %s35 = sadd.s32 1, %s30
      %p36 = scmp.ge.s32.totalorder %s35, 1
      %s37 = scalar_select %p36, 0, %s35
      %s38 = sadd.s32 1, %s29
      %s39 = scalar_select %p36, %s38, %s29
      %p40 = scmp.ge.s32.totalorder %s39, 2
      %s41 = scalar_select %p40, 0, %s39
      %s42 = ssub.s32 %s29, %s41
      %s43 = ssub.s32 %s30, %s37
      %s44 = sor.u32 %s42, %s43
      %p45 = scmp.eq.s32.totalorder %s44, 0
      %s47 = sadd.s32 %s46, 1
      %s48 = scalar_select %p45, %s46, %s47
      %p51 = pneg %p45
      %p52 = scmp.eq.s32.totalorder %s22, 1
      %p53 = por %p51, %p52
      %p54 = scmp.ne.s32.totalorder %s46, %s49
      %p55 = scmp.eq.s32.totalorder %s22, 0
      %p56 = por %p54, %p55
      %p57 = scmp.ne.s32.totalorder %s46, %s49
      %p58 = scmp.eq.s32.totalorder %s27, 1
      %p59 = por %p57, %p58
      %p60 = scmp.ne.s32.totalorder %s49, %s50
      %p61 = scmp.eq.s32.totalorder %s27, 0
      %p62 = por %p60, %p61
      %p63 = scmp.ne.s32.totalorder %s49, %s50
      %p64 = scmp.eq.s32.totalorder %s28, 1
      %p65 = por %p63, %p64
      %p67 = scmp.ne.s32.totalorder %s50, %s66
      %p68 = scmp.eq.s32.totalorder %s28, 0
      %p69 = por %p67, %p68
      %s71 = sadd.s32 %s70, 1
      %p74 = scmp.eq.s32.totalorder %s22, 1
      %p75 = scmp.ne.s32.totalorder %s70, %s72
      %p76 = scmp.eq.s32.totalorder %s22, 0
      %p77 = por %p75, %p76
      %p78 = scmp.ne.s32.totalorder %s70, %s72
      %p79 = scmp.eq.s32.totalorder %s27, 1
      %p80 = por %p78, %p79
      %p81 = scmp.ne.s32.totalorder %s72, %s73
      %p82 = scmp.eq.s32.totalorder %s27, 0
      %p83 = por %p81, %p82
      %p84 = scmp.ne.s32.totalorder %s72, %s73
      %p85 = scmp.eq.s32.totalorder %s28, 1
      %p86 = por %p84, %p85
      %p88 = scmp.ne.s32.totalorder %s73, %s87
      %p89 = scmp.eq.s32.totalorder %s28, 0
      %p90 = por %p88, %p89
      %s92 = sadd.s32 %s91, 1
      %p95 = scmp.eq.s32.totalorder %s22, 1
      %p96 = scmp.ne.s32.totalorder %s91, %s93
      %p97 = scmp.eq.s32.totalorder %s22, 0
      %p98 = por %p96, %p97
      %p99 = scmp.ne.s32.totalorder %s91, %s93
      %p100 = scmp.eq.s32.totalorder %s27, 1
      %p101 = por %p99, %p100
      %p102 = scmp.ne.s32.totalorder %s93, %s94
      %p103 = scmp.eq.s32.totalorder %s27, 0
      %p104 = por %p102, %p103
      %p105 = scmp.ne.s32.totalorder %s93, %s94
      %p106 = scmp.eq.s32.totalorder %s28, 1
      %p107 = por %p105, %p106
      %p109 = scmp.ne.s32.totalorder %s94, %s108
      %p110 = scmp.eq.s32.totalorder %s28, 0
      %p111 = por %p109, %p110
      %s112 = ssub.s32 %s29, %s41
      %s113 = ssub.s32 %s30, %s37
      %s114 = sor.u32 %s112, %s113
      %p115 = scmp.eq.s32.totalorder %s114, 0
      %s117 = sadd.s32 %s116, 1
      %s118 = scalar_select %p115, %s116, %s117
      %p121 = pneg %p115
      %p122 = scmp.eq.s32.totalorder %s22, 1
      %p123 = por %p121, %p122
      %p124 = scmp.ne.s32.totalorder %s116, %s119
      %p125 = scmp.eq.s32.totalorder %s22, 0
      %p126 = por %p124, %p125
      %p127 = scmp.ne.s32.totalorder %s116, %s119
      %p128 = scmp.eq.s32.totalorder %s27, 1
      %p129 = por %p127, %p128
      %p130 = scmp.ne.s32.totalorder %s119, %s120
      %p131 = scmp.eq.s32.totalorder %s27, 0
      %p132 = por %p130, %p131
      %p133 = scmp.ne.s32.totalorder %s119, %s120
      %p134 = scmp.eq.s32.totalorder %s28, 1
      %p135 = por %p133, %p134
      %p137 = scmp.ne.s32.totalorder %s120, %s136
      %p138 = scmp.eq.s32.totalorder %s28, 0
      %p139 = por %p137, %p138
      %s140 = ssub.s32 %s29, %s41
      %s141 = ssub.s32 %s30, %s37
      %s142 = sor.u32 %s140, %s141
      %p143 = scmp.eq.s32.totalorder %s142, 0
      %s145 = sadd.s32 %s144, 1
      %s146 = scalar_select %p143, %s144, %s145
      %p149 = pneg %p143
      %p150 = scmp.eq.s32.totalorder %s22, 1
      %p151 = por %p149, %p150
      %p152 = scmp.ne.s32.totalorder %s144, %s147
      %p153 = scmp.eq.s32.totalorder %s22, 0
      %p154 = por %p152, %p153
      %p155 = scmp.ne.s32.totalorder %s144, %s147
      %p156 = scmp.eq.s32.totalorder %s27, 1
      %p157 = por %p155, %p156
      %p158 = scmp.ne.s32.totalorder %s147, %s148
      %p159 = scmp.eq.s32.totalorder %s27, 0
      %p160 = por %p158, %p159
      %p161 = scmp.ne.s32.totalorder %s147, %s148
      %p162 = scmp.eq.s32.totalorder %s28, 1
      %p163 = por %p161, %p162
      %p165 = scmp.ne.s32.totalorder %s148, %s164
      %p166 = scmp.eq.s32.totalorder %s28, 0
      %p167 = por %p165, %p166
      %s168 = ssub.s32 %s29, %s41
      %s169 = ssub.s32 %s30, %s37
      %s170 = sor.u32 %s168, %s169
      %p171 = scmp.eq.s32.totalorder %s170, 0
      %s173 = sadd.s32 %s172, 1
      %s174 = scalar_select %p171, %s172, %s173
      %p177 = pneg %p171
      %p178 = scmp.eq.s32.totalorder %s22, 1
      %p179 = por %p177, %p178
      %p180 = scmp.ne.s32.totalorder %s172, %s175
      %p181 = scmp.eq.s32.totalorder %s22, 0
      %p182 = por %p180, %p181
      %p183 = scmp.ne.s32.totalorder %s172, %s175
      %p184 = scmp.eq.s32.totalorder %s27, 1
      %p185 = por %p183, %p184
      %p186 = scmp.ne.s32.totalorder %s175, %s176
      %p187 = scmp.eq.s32.totalorder %s27, 0
      %p188 = por %p186, %p187
      %p189 = scmp.ne.s32.totalorder %s175, %s176
      %p190 = scmp.eq.s32.totalorder %s28, 1
      %p191 = por %p189, %p190
      %p193 = scmp.ne.s32.totalorder %s176, %s192
      %p194 = scmp.eq.s32.totalorder %s28, 0
      %p195 = por %p193, %p194
      %p196 = scmp.le.s32.totalorder 1, %s22
      %p197 = scmp.lt.s32.totalorder %s22, 3
      %p198 = pnand %p196, %p197
      %p199 = pneg %p198
      // Predicated region
      $region9: #{tpu_custom_call.1} parent=5 // pred_check
        _
      $region10: #{tpu_custom_call.1} parent=5 // pred_check_branch
        %201 = sbr.rel (%p198) target = $region12
      $region11: #{tpu_custom_call.1} parent=5 // pred_region
        %s202 = ssub.s32 %s22, 1
        // Predicated region
        $region13: #{tpu_custom_call.1} parent=11 // pred_check
          %p203 = pneg %p83
        $region14: #{tpu_custom_call.1} parent=11 // pred_check_branch
          %205 = sbr.rel (%p203) target = $region16
        $region15: #{tpu_custom_call.1} parent=11 // pred_region
          %s207 = ssub.s32 1024, 1024
          %208 = vsyncadd [#allocation6], %s207
          %s209 = sshll.u32 [#allocation5], 4
          %s210 = int_to_ptr.vmem [resolvable:$true] %s209
          %215 = dma.hbm_to_vmem [thread:$0]  %s1, 1024, %s210, [#allocation6], 128, 128, 8
        $region16: #{tpu_custom_call.1} parent=11 // pred_fallthru
          _
        // Predicated region
        $region17: #{tpu_custom_call.1} parent=11 // pred_check
          %p216 = pneg %p104
        $region18: #{tpu_custom_call.1} parent=11 // pred_check_branch
          %218 = sbr.rel (%p216) target = $region20
        $region19: #{tpu_custom_call.1} parent=11 // pred_region
          %s220 = ssub.s32 256, 256
          %221 = vsyncadd [#allocation6], %s220
          %s222 = sshll.u32 [#allocation7], 4
          %s223 = int_to_ptr.vmem [resolvable:$true] %s222
          %228 = dma.hbm_to_vmem [thread:$0]  %s2, 256, %s223, [#allocation6], 128, 128, 8
        $region20: #{tpu_custom_call.1} parent=11 // pred_fallthru
          _
      $region12: #{tpu_custom_call.1} parent=5 // pred_fallthru
        _
      %p229 = scmp.lt.s32.totalorder %s22, 2
      // Predicated region
      $region21: #{tpu_custom_call.1} parent=5 // pred_check
        %p230 = pneg %p229
      $region22: #{tpu_custom_call.1} parent=5 // pred_check_branch
        %232 = sbr.rel (%p230) target = $region24
      $region23: #{tpu_custom_call.1} parent=5 // pred_region
        // Predicated region
        $region25: #{tpu_custom_call.1} parent=23 // pred_check
          %p233 = pneg %p56
        $region26: #{tpu_custom_call.1} parent=23 // pred_check_branch
          %235 = sbr.rel (%p233) target = $region28
        $region27: #{tpu_custom_call.1} parent=23 // pred_region
          %s236 = sand.u32 %s46, 1
          %s237 = scalar_lea.sflag [#allocation3], %s236
          %s238 = sand.u32 %s46, 1
          %s239 = smul.addr %s238, 32
          %s240 = scalar_lea.vmem [#allocation2], %s239
          %s241 = smul.u32 2, %s30
          %s243 = ssub.s32 512, 512
          %244 = vsyncadd %s237, %s243
          %s245 = smul.addr %s29, 4
          %s246 = sadd.s32 %s241, %s245
          %s247 = smul.addr %s246, 128
          %s248 = scalar_lea.hbm %s0, %s247
          %s249 = sshll.u32 %s240, 4
          %s250 = int_to_ptr.vmem [resolvable:$true] %s249
          %255 = dma.hbm_to_vmem [thread:$0]  %s248, 512, %s250, %s237, 256, 256, 16
        $region28: #{tpu_custom_call.1} parent=23 // pred_fallthru
          _
      $region24: #{tpu_custom_call.1} parent=5 // pred_fallthru
        _
      %p256 = scmp.le.s32.totalorder 1, %s22
      %p257 = scmp.lt.s32.totalorder %s22, 3
      %p258 = pnand %p256, %p257
      %p259 = pneg %p258
      // Predicated region
      $region29: #{tpu_custom_call.1} parent=5 // pred_check
        _
      $region30: #{tpu_custom_call.1} parent=5 // pred_check_branch
        %261 = sbr.rel (%p258) target = $region32
      $region31: #{tpu_custom_call.1} parent=5 // pred_region
        %s262 = ssub.s32 %s22, 1
        %s263 = sand.u32 %s49, 1
        %s264 = scalar_lea.sflag [#allocation3], %s263
        %s265 = sand.u32 %s49, 1
        %s266 = smul.addr %s265, 32
        %s267 = scalar_lea.vmem [#allocation2], %s266
        // Predicated region
        $region33: #{tpu_custom_call.1} parent=31 // pred_check
          %p268 = pneg %p62
        $region34: #{tpu_custom_call.1} parent=31 // pred_check_branch
          %270 = sbr.rel (%p268) target = $region36
        $region35: #{tpu_custom_call.1} parent=31 // pred_region
          %271 = dma.done %s264, 512
        $region36: #{tpu_custom_call.1} parent=31 // pred_fallthru
          _
        // Predicated region
        $region37: #{tpu_custom_call.1} parent=31 // pred_check
          %p272 = pneg %p83
        $region38: #{tpu_custom_call.1} parent=31 // pred_check_branch
          %274 = sbr.rel (%p272) target = $region40
        $region39: #{tpu_custom_call.1} parent=31 // pred_region
          %275 = dma.done [#allocation6], 1024
        $region40: #{tpu_custom_call.1} parent=31 // pred_fallthru
          _
        // Predicated region
        $region41: #{tpu_custom_call.1} parent=31 // pred_check
          %p276 = pneg %p104
        $region42: #{tpu_custom_call.1} parent=31 // pred_check_branch
          %278 = sbr.rel (%p276) target = $region44
        $region43: #{tpu_custom_call.1} parent=31 // pred_region
          %279 = dma.done [#allocation6], 256
        $region44: #{tpu_custom_call.1} parent=31 // pred_fallthru
          _
        %s280 = sand.u32 %s49, 1
        %s281 = scalar_lea.sflag [#allocation3], %s280
        %s282 = sand.u32 %s49, 1
        %s283 = smul.addr %s282, 32
        %s284 = scalar_lea.vmem [#allocation2], %s283
        %p285 = pneg %p62
        %p286 = pneg %p59
        %p287 = pneg %p83
        %p288 = pneg %p80
        %p289 = pneg %p104
        %p290 = pneg %p101
        %p291 = pneg %p132
        %p292 = pneg %p129
        %s293 = sand.u32 %s119, 1
        %s294 = scalar_lea.sflag [#allocation4], %s293
        %s295 = sand.u32 %s119, 1
        %s296 = smul.addr %s295, 32
        %s297 = scalar_lea.vmem [#allocation8], %s296
        %p298 = pneg %p160
        %p299 = pneg %p157
        %s300 = sand.u32 %s27, 1
        %s301 = scalar_lea.sflag [#allocation10], %s300
        %s302 = sand.u32 %s147, 1
        %s303 = smul.addr %s302, 2
        %s304 = scalar_lea.vmem [#allocation9], %s303
        %p305 = pneg %p188
        %p306 = pneg %p185
        %s307 = sand.u32 %s27, 1
        %s308 = scalar_lea.sflag [#allocation10], %s307
        %s309 = sand.u32 %s175, 1
        %s310 = scalar_lea.vmem [#allocation11], %s309
        %s311 = smul.u32 2, %s32
        %s312 = smul.u32 2, %s32
        %s313 = smul.u32 2, %s32
        %v314 = vld [vmem:[%s267] sm:$0xff]
        %v315 = vld [vmem:[%s267 + $0x8] sm:$0xff]
        %v316 = vld [vmem:[%s267 + $0x10] sm:$0xff]
        %v317 = vld [vmem:[%s267 + $0x18] sm:$0xff]
        %v318 = vld [vmem:[#allocation5] sm:$0xff]
        %v319 = vld [vmem:[#allocation5 + $0x8] sm:$0xff]
        %v320 = vld [vmem:[#allocation5 + $0x10] sm:$0xff]
        %v321 = vld [vmem:[#allocation5 + $0x18] sm:$0xff]
        %v322 = vld [vmem:[#allocation5 + $0x20] sm:$0xff]
        %v323 = vld [vmem:[#allocation5 + $0x28] sm:$0xff]
        %v324 = vld [vmem:[#allocation5 + $0x30] sm:$0xff]
        %v325 = vld [vmem:[#allocation5 + $0x38] sm:$0xff]
        %vm326 = vcmask 130048
        %v328 = vsel %vm326, %v318, 0
        %v331 = vsel %vm326, %v319, 0
        %v334 = vsel %vm326, %v320, 0
        %v337 = vsel %vm326, %v321, 0
        %v340 = vsel %vm326, %v322, 0
        %v343 = vsel %vm326, %v323, 0
        %v346 = vsel %vm326, %v324, 0
        %v349 = vsel %vm326, %v325, 0
        %351 = vmatprep.subr.mxu0 %v315
        %352 = vmatpush1.msra.mxu0 %v314
        %353 = vmatprep.subr.mxu0 %v317
        %354 = vmatpush1.msra.mxu0 %v316
        %355 = vmatprep.subr.mxu0 0.0
        %356 = vmatpush1.msra.mxu0 0.0
        %357 = vmatprep.subr.mxu0 0.0
        %358 = vmatpush1.msra.mxu0 0.0
        %359 = vmatprep.subr.mxu0 0.0
        %360 = vmatpush1.msra.mxu0 0.0
        %361 = vmatprep.subr.mxu0 0.0
        %362 = vmatpush1.msra.mxu0 0.0
        %363 = vmatprep.subr.mxu0 0.0
        %364 = vmatpush1.msra.mxu0 0.0
        %365 = vmatprep.subr.mxu0 0.0
        %366 = vmatpush1.msra.mxu0 0.0
        %367 = vmatprep.subr.mxu0 0.0
        %368 = vmatpush1.msra.mxu0 0.0
        %369 = vmatprep.subr.mxu0 0.0
        %370 = vmatpush1.msra.mxu0 0.0
        %371 = vmatprep.subr.mxu0 0.0
        %372 = vmatpush1.msra.mxu0 0.0
        %373 = vmatprep.subr.mxu0 0.0
        %374 = vmatpush1.msra.mxu0 0.0
        %375 = vmatprep.subr.mxu0 0.0
        %376 = vmatpush1.msra.mxu0 0.0
        %377 = vmatprep.subr.mxu0 0.0
        %378 = vmatpush1.msra.mxu0 0.0
        %379 = vmatprep.subr.mxu0 0.0
        %380 = vmatpush1.msra.mxu0 0.0
        %381 = vmatprep.subr.mxu0 0.0
        %382 = vmatpush1.msra.mxu0 0.0
        %383 = vmatprep.subr.mxu0 0.0
        %384 = vmatpush1.msra.mxu0 0.0
        %385 = vmatprep.subr.mxu0 0.0
        %386 = vmatpush1.msra.mxu0 0.0
        %387 = vmatprep.subr.mxu0 0.0
        %388 = vmatpush1.msra.mxu0 0.0
        %389 = vmatprep.subr.mxu0 0.0
        %390 = vmatpush1.msra.mxu0 0.0
        %391 = vmatprep.subr.mxu0 0.0
        %392 = vmatpush1.msra.mxu0 0.0
        %393 = vmatprep.subr.mxu0 0.0
        %394 = vmatpush1.msra.mxu0 0.0
        %395 = vmatprep.subr.mxu0 0.0
        %396 = vmatpush1.msra.mxu0 0.0
        %397 = vmatprep.subr.mxu0 0.0
        %398 = vmatpush1.msra.mxu0 0.0
        %399 = vmatprep.subr.mxu0 0.0
        %400 = vmatpush1.msra.mxu0 0.0
        %401 = vmatprep.subr.mxu0 0.0
        %402 = vmatpush1.msra.mxu0 0.0
        %403 = vmatprep.subr.mxu0 0.0
        %404 = vmatpush1.msra.mxu0 0.0
        %405 = vmatprep.subr.mxu0 0.0
        %406 = vmatpush1.msra.mxu0 0.0
        %407 = vmatprep.subr.mxu0 0.0
        %408 = vmatpush1.msra.mxu0 0.0
        %409 = vmatprep.subr.mxu0 0.0
        %410 = vmatpush1.msra.mxu0 0.0
        %411 = vmatprep.subr.mxu0 0.0
        %412 = vmatpush1.msra.mxu0 0.0
        %413 = vmatprep.subr.mxu0 0.0
        %414 = vmatpush1.msra.mxu0 0.0
        %415 = vmatprep.mubr.f32.mxu0 0.0
        %416 = vmatmul.mubr.f32.gmra.mrb[0].mxu0 %v328
        %v417 = vpop.f32.mrb[0].mxu0
        %v418 = vadd.f32 0.0, %v417
        %v419 = vpop.f32.mrb[0].mxu0
        %v420 = vadd.f32 0.0, %v419
        %421 = vmatprep.mubr.f32.mxu0 0.0
        %422 = vmatmul.mubr.f32.gmra.mrb[0].mxu0 %v331
        %v423 = vpop.f32.mrb[0].mxu0
        %v424 = vadd.f32 0.0, %v423
        %v425 = vpop.f32.mrb[0].mxu0
        %v426 = vadd.f32 0.0, %v425
        %427 = vmatprep.mubr.f32.mxu0 0.0
        %428 = vmatmul.mubr.f32.gmra.mrb[0].mxu0 %v334
        %v429 = vpop.f32.mrb[0].mxu0
        %v430 = vadd.f32 0.0, %v429
        %v431 = vpop.f32.mrb[0].mxu0
        %v432 = vadd.f32 0.0, %v431
        %433 = vmatprep.mubr.f32.mxu0 0.0
        %434 = vmatmul.mubr.f32.gmra.mrb[0].mxu0 %v337
        %v435 = vpop.f32.mrb[0].mxu0
        %v436 = vadd.f32 0.0, %v435
        %v437 = vpop.f32.mrb[0].mxu0
        %v438 = vadd.f32 0.0, %v437
        %439 = vmatprep.mubr.f32.mxu0 0.0
        %440 = vmatmul.mubr.f32.gmra.mrb[0].mxu0 %v340
        %v441 = vpop.f32.mrb[0].mxu0
        %v442 = vadd.f32 0.0, %v441
        %v443 = vpop.f32.mrb[0].mxu0
        %v444 = vadd.f32 0.0, %v443
        %445 = vmatprep.mubr.f32.mxu0 0.0
        %446 = vmatmul.mubr.f32.gmra.mrb[0].mxu0 %v343
        %v447 = vpop.f32.mrb[0].mxu0
        %v448 = vadd.f32 0.0, %v447
        %v449 = vpop.f32.mrb[0].mxu0
        %v450 = vadd.f32 0.0, %v449
        %451 = vmatprep.mubr.f32.mxu0 0.0
        %452 = vmatmul.mubr.f32.gmra.mrb[0].mxu0 %v346
        %v453 = vpop.f32.mrb[0].mxu0
        %v454 = vadd.f32 0.0, %v453
        %v455 = vpop.f32.mrb[0].mxu0
        %v456 = vadd.f32 0.0, %v455
        %457 = vmatprep.mubr.f32.mxu0 0.0
        %458 = vmatmul.mubr.f32.gmra.mrb[0].mxu0 %v349
        %v459 = vpop.f32.mrb[0].mxu0
        %v460 = vadd.f32 0.0, %v459
        %v461 = vpop.f32.mrb[0].mxu0
        %v462 = vadd.f32 0.0, %v461
        %463 = vdwg.mxu0
        %v464 = vlaneseq
        %v465 = vshrl.u32 %v464, 7
        %v466 = vadd.s32 %v465, 8
        %v467 = vadd.s32 %v465, 16
        %v468 = vadd.s32 %v465, 24
        %v469 = vadd.s32 %v465, 32
        %v470 = vadd.s32 %v465, 40
        %v471 = vadd.s32 %v465, 48
        %v472 = vadd.s32 %v465, 56
        %v473 = vmax.f32 %v418, %v430
        %v474 = vmax.f32 %v424, %v436
        %v475 = vmax.f32 %v473, %v442
        %v476 = vmax.f32 %v474, %v448
        %v477 = vmax.f32 %v475, %v454
        %v478 = vmax.f32 %v476, %v460
        %v479 = vmax.f32 %v477, %v478
        %v480 = vrot.slane %v479, 4
        %v481 = vmax.f32 %v479, %v480
        %v482 = vrot.slane %v481, 2
        %v483 = vmax.f32 %v481, %v482
        %v484 = vrot.slane %v483, 1
        %v485 = vmax.f32 %v483, %v484
        %v486 = vmax.f32 %v420, %v432
        %v487 = vmax.f32 %v426, %v438
        %v488 = vmax.f32 %v486, %v444
        %v489 = vmax.f32 %v487, %v450
        %v490 = vmax.f32 %v488, %v456
        %v491 = vmax.f32 %v489, %v462
        %v492 = vmax.f32 %v490, %v491
        %v493 = vrot.slane %v492, 4
        %v494 = vmax.f32 %v492, %v493
        %v495 = vrot.slane %v494, 2
        %v496 = vmax.f32 %v494, %v495
        %v497 = vrot.slane %v496, 1
        %v498 = vmax.f32 %v496, %v497
        %vm499 = vcmp.eq.f32.partialorder %v418, %v485
        %vm500 = vcmp.eq.f32.partialorder %v420, %v498
        %vm501 = vcmp.eq.f32.partialorder %v424, %v485
        %vm502 = vcmp.eq.f32.partialorder %v426, %v498
        %vm503 = vcmp.eq.f32.partialorder %v430, %v485
        %vm504 = vcmp.eq.f32.partialorder %v432, %v498
        %vm505 = vcmp.eq.f32.partialorder %v436, %v485
        %vm506 = vcmp.eq.f32.partialorder %v438, %v498
        %vm507 = vcmp.eq.f32.partialorder %v442, %v485
        %vm508 = vcmp.eq.f32.partialorder %v444, %v498
        %vm509 = vcmp.eq.f32.partialorder %v448, %v485
        %vm510 = vcmp.eq.f32.partialorder %v450, %v498
        %vm511 = vcmp.eq.f32.partialorder %v454, %v485
        %vm512 = vcmp.eq.f32.partialorder %v456, %v498
        %vm513 = vcmp.eq.f32.partialorder %v460, %v485
        %vm514 = vcmp.eq.f32.partialorder %v462, %v498
        %v515 = vsel %vm499, %v465, 64
        %v516 = vsel %vm500, %v465, 64
        %v517 = vsel %vm501, %v466, 64
        %v518 = vsel %vm502, %v466, 64
        %v519 = vsel %vm503, %v467, 64
        %v520 = vsel %vm504, %v467, 64
        %v521 = vsel %vm505, %v468, 64
        %v522 = vsel %vm506, %v468, 64
        %v523 = vsel %vm507, %v469, 64
        %v524 = vsel %vm508, %v469, 64
        %v525 = vsel %vm509, %v470, 64
        %v526 = vsel %vm510, %v470, 64
        %v527 = vsel %vm511, %v471, 64
        %v528 = vsel %vm512, %v471, 64
        %v529 = vsel %vm513, %v472, 64
        %v530 = vsel %vm514, %v472, 64
        %vm531 = vcmp.lt.s32.totalorder %v515, %v519
        %v532 = vsel %vm531, %v515, %v519
        %vm533 = vcmp.lt.s32.totalorder %v517, %v521
        %v534 = vsel %vm533, %v517, %v521
        %vm535 = vcmp.lt.s32.totalorder %v532, %v523
        %v536 = vsel %vm535, %v532, %v523
        %vm537 = vcmp.lt.s32.totalorder %v534, %v525
        %v538 = vsel %vm537, %v534, %v525
        %vm539 = vcmp.lt.s32.totalorder %v536, %v527
        %v540 = vsel %vm539, %v536, %v527
        %vm541 = vcmp.lt.s32.totalorder %v538, %v529
        %v542 = vsel %vm541, %v538, %v529
        %vm543 = vcmp.lt.s32.totalorder %v540, %v542
        %v544 = vsel %vm543, %v540, %v542
        %v545 = vrot.slane %v544, 4
        %vm546 = vcmp.lt.s32.totalorder %v544, %v545
        %v547 = vsel %vm546, %v544, %v545
        %v548 = vrot.slane %v547, 2
        %vm549 = vcmp.lt.s32.totalorder %v547, %v548
        %v550 = vsel %vm549, %v547, %v548
        %v551 = vrot.slane %v550, 1
        %vm552 = vcmp.lt.s32.totalorder %v550, %v551
        %v553 = vsel %vm552, %v550, %v551
        %vm554 = vcmp.lt.s32.totalorder %v516, %v520
        %v555 = vsel %vm554, %v516, %v520
        %vm556 = vcmp.lt.s32.totalorder %v518, %v522
        %v557 = vsel %vm556, %v518, %v522
        %vm558 = vcmp.lt.s32.totalorder %v555, %v524
        %v559 = vsel %vm558, %v555, %v524
        %vm560 = vcmp.lt.s32.totalorder %v557, %v526
        %v561 = vsel %vm560, %v557, %v526
        %vm562 = vcmp.lt.s32.totalorder %v559, %v528
        %v563 = vsel %vm562, %v559, %v528
        %vm564 = vcmp.lt.s32.totalorder %v561, %v530
        %v565 = vsel %vm564, %v561, %v530
        %vm566 = vcmp.lt.s32.totalorder %v563, %v565
        %v567 = vsel %vm566, %v563, %v565
        %v568 = vrot.slane %v567, 4
        %vm569 = vcmp.lt.s32.totalorder %v567, %v568
        %v570 = vsel %vm569, %v567, %v568
        %v571 = vrot.slane %v570, 2
        %vm572 = vcmp.lt.s32.totalorder %v570, %v571
        %v573 = vsel %vm572, %v570, %v571
        %v574 = vrot.slane %v573, 1
        %vm575 = vcmp.lt.s32.totalorder %v573, %v574
        %v576 = vsel %vm575, %v573, %v574
        %vm577 = vcmp.eq.s32.totalorder %v465, %v553
        %vm578 = vcmp.eq.s32.totalorder %v465, %v576
        %vm579 = vcmp.eq.s32.totalorder %v466, %v553
        %vm580 = vcmp.eq.s32.totalorder %v466, %v576
        %vm581 = vcmp.eq.s32.totalorder %v467, %v553
        %vm582 = vcmp.eq.s32.totalorder %v467, %v576
        %vm583 = vcmp.eq.s32.totalorder %v468, %v553
        %vm584 = vcmp.eq.s32.totalorder %v468, %v576
        %vm585 = vcmp.eq.s32.totalorder %v469, %v553
        %vm586 = vcmp.eq.s32.totalorder %v469, %v576
        %vm587 = vcmp.eq.s32.totalorder %v470, %v553
        %vm588 = vcmp.eq.s32.totalorder %v470, %v576
        %vm589 = vcmp.eq.s32.totalorder %v471, %v553
        %vm590 = vcmp.eq.s32.totalorder %v471, %v576
        %vm591 = vcmp.eq.s32.totalorder %v472, %v553
        %vm592 = vcmp.eq.s32.totalorder %v472, %v576
        %v593 = vsel %vm577, 1, 0
        %v594 = vsel %vm578, 1, 0
        %v595 = vsel %vm579, 1, 0
        %v596 = vsel %vm580, 1, 0
        %v597 = vsel %vm581, 1, 0
        %v598 = vsel %vm582, 1, 0
        %v599 = vsel %vm583, 1, 0
        %v600 = vsel %vm584, 1, 0
        %v601 = vsel %vm585, 1, 0
        %v602 = vsel %vm586, 1, 0
        %v603 = vsel %vm587, 1, 0
        %v604 = vsel %vm588, 1, 0
        %v605 = vsel %vm589, 1, 0
        %v606 = vsel %vm590, 1, 0
        %v607 = vsel %vm591, 1, 0
        %v608 = vsel %vm592, 1, 0
        %v609 = vcvt.s32.f32 %v593
        %v610 = vcvt.s32.f32 %v594
        %v611 = vcvt.s32.f32 %v595
        %v612 = vcvt.s32.f32 %v596
        %v613 = vcvt.s32.f32 %v597
        %v614 = vcvt.s32.f32 %v598
        %v615 = vcvt.s32.f32 %v599
        %v616 = vcvt.s32.f32 %v600
        %v617 = vcvt.s32.f32 %v601
        %v618 = vcvt.s32.f32 %v602
        %v619 = vcvt.s32.f32 %v603
        %v620 = vcvt.s32.f32 %v604
        %v621 = vcvt.s32.f32 %v605
        %v622 = vcvt.s32.f32 %v606
        %v623 = vcvt.s32.f32 %v607
        %v624 = vcvt.s32.f32 %v608
        %v625 = vld [vmem:[#allocation7] sm:$0xff]
        %v626 = vld [vmem:[#allocation7 + $0x8] sm:$0xff]
        %vm627 = vcmask 523264
        %v629 = vsel %vm627, %v625, 0
        %v632 = vsel %vm627, %v626, 0
        %634 = vmatprep.subr.mxu0 %v610
        %635 = vmatpush1.msra.mxu0 %v609
        %636 = vmatprep.subr.mxu0 %v612
        %637 = vmatpush1.msra.mxu0 %v611
        %638 = vmatprep.subr.mxu0 %v614
        %639 = vmatpush1.msra.mxu0 %v613
        %640 = vmatprep.subr.mxu0 %v616
        %641 = vmatpush1.msra.mxu0 %v615
        %642 = vmatprep.subr.mxu0 %v618
        %643 = vmatpush1.msra.mxu0 %v617
        %644 = vmatprep.subr.mxu0 %v620
        %645 = vmatpush1.msra.mxu0 %v619
        %646 = vmatprep.subr.mxu0 %v622
        %647 = vmatpush1.msra.mxu0 %v621
        %648 = vmatprep.subr.mxu0 %v624
        %649 = vmatpush1.msra.mxu0 %v623
        %650 = vmatprep.subr.mxu0 0.0
        %651 = vmatpush1.msra.mxu0 0.0
        %652 = vmatprep.subr.mxu0 0.0
        %653 = vmatpush1.msra.mxu0 0.0
        %654 = vmatprep.subr.mxu0 0.0
        %655 = vmatpush1.msra.mxu0 0.0
        %656 = vmatprep.subr.mxu0 0.0
        %657 = vmatpush1.msra.mxu0 0.0
        %658 = vmatprep.subr.mxu0 0.0
        %659 = vmatpush1.msra.mxu0 0.0
        %660 = vmatprep.subr.mxu0 0.0
        %661 = vmatpush1.msra.mxu0 0.0
        %662 = vmatprep.subr.mxu0 0.0
        %663 = vmatpush1.msra.mxu0 0.0
        %664 = vmatprep.subr.mxu0 0.0
        %665 = vmatpush1.msra.mxu0 0.0
        %666 = vmatprep.subr.mxu0 0.0
        %667 = vmatpush1.msra.mxu0 0.0
        %668 = vmatprep.subr.mxu0 0.0
        %669 = vmatpush1.msra.mxu0 0.0
        %670 = vmatprep.subr.mxu0 0.0
        %671 = vmatpush1.msra.mxu0 0.0
        %672 = vmatprep.subr.mxu0 0.0
        %673 = vmatpush1.msra.mxu0 0.0
        %674 = vmatprep.subr.mxu0 0.0
        %675 = vmatpush1.msra.mxu0 0.0
        %676 = vmatprep.subr.mxu0 0.0
        %677 = vmatpush1.msra.mxu0 0.0
        %678 = vmatprep.subr.mxu0 0.0
        %679 = vmatpush1.msra.mxu0 0.0
        %680 = vmatprep.subr.mxu0 0.0
        %681 = vmatpush1.msra.mxu0 0.0
        %682 = vmatprep.subr.mxu0 0.0
        %683 = vmatpush1.msra.mxu0 0.0
        %684 = vmatprep.subr.mxu0 0.0
        %685 = vmatpush1.msra.mxu0 0.0
        %686 = vmatprep.subr.mxu0 0.0
        %687 = vmatpush1.msra.mxu0 0.0
        %688 = vmatprep.subr.mxu0 0.0
        %689 = vmatpush1.msra.mxu0 0.0
        %690 = vmatprep.subr.mxu0 0.0
        %691 = vmatpush1.msra.mxu0 0.0
        %692 = vmatprep.subr.mxu0 0.0
        %693 = vmatpush1.msra.mxu0 0.0
        %694 = vmatprep.subr.mxu0 0.0
        %695 = vmatpush1.msra.mxu0 0.0
        %696 = vmatprep.subr.mxu0 0.0
        %697 = vmatpush1.msra.mxu0 0.0
        %698 = vmatprep.mubr.f32.mxu0 0.0
        %699 = vmatmul.mubr.f32.gmra.mrb[0].mxu0 %v629
        %v700 = vpop.f32.mrb[0].mxu0
        %v701 = vadd.f32 0.0, %v700
        %v702 = vpop.f32.mrb[0].mxu0
        %v703 = vadd.f32 0.0, %v702
        %704 = vmatprep.mubr.f32.mxu0 0.0
        %705 = vmatmul.mubr.f32.gmra.mrb[0].mxu0 %v632
        %v706 = vpop.f32.mrb[0].mxu0
        %v707 = vadd.f32 0.0, %v706
        %v708 = vpop.f32.mrb[0].mxu0
        %v709 = vadd.f32 0.0, %v708
        %710 = vdwg.mxu0
        %711 = vst [vmem:[%s297] sm:$0xff] %v701
        %712 = vst [vmem:[%s297 + $0x8] sm:$0xff] %v703
        %713 = vst [vmem:[%s297 + $0x10] sm:$0xff] %v707
        %714 = vst [vmem:[%s297 + $0x18] sm:$0xff] %v709
        %v715 = vcombine.low %v553, %v576
        %v717 = vunpack.c.l.s4 1966171168
        %v718 = vunpack.c.0.s8 %v717
        %v719 = vlaneseq
        %v720 = vshrl.u32 %v719, 7
        %v721 = vsub.s32 %v718, %v720
        %v722 = vrot.slane %v715, %v721
        %v724 = vunpack.c.l.s4 1966171168
        %v725 = vunpack.c.0.s8 %v724
        %v726 = vlaneseq
        %v727 = vshrl.u32 %v726, 7
        %v728 = vsub.s32 %v725, %v727
        %v729 = vrot.slane %v722, %v728
        %v730 = vlaneseq
        %vm731 = vcmp.ge.s32.totalorder %v730, 0
        %vm732 = vcmp.lt.s32.totalorder %v730, 256
        %vm733 = vmand %vm731, %vm732
        %734 = vst.msk [vmem:[%s304] sm:$0x3] %vm733, %v729
        %v735 = vsub.f32 %v701, %v314
        %v736 = vsub.f32 %v703, %v315
        %v737 = vsub.f32 %v707, %v316
        %v738 = vsub.f32 %v709, %v317
        %v739 = vmul.f32 %v735, %v735
        %v740 = vmul.f32 %v736, %v736
        %v741 = vmul.f32 %v737, %v737
        %v742 = vmul.f32 %v738, %v738
        %v743 = vadd.f32 %v739, %v741
        %v744 = vrot.slane %v743, 4
        %v745 = vadd.f32 %v743, %v744
        %v746 = vrot.slane %v745, 2
        %v747 = vadd.f32 %v745, %v746
        %v748 = vrot.slane %v747, 1
        %v749 = vadd.f32 %v747, %v748
        %v750 = vadd.f32 %v740, %v742
        %v751 = vrot.slane %v750, 4
        %v752 = vadd.f32 %v750, %v751
        %v753 = vrot.slane %v752, 2
        %v754 = vadd.f32 %v752, %v753
        %v755 = vrot.slane %v754, 1
        %v756 = vadd.f32 %v754, %v755
        %v757 = vadd.f32 %v749, %v756
        %758 = vst [vmem:[%s310] sm:$0x1] %v757
        %s759 = sand.u32 %s119, 1
        %s760 = scalar_lea.sflag [#allocation4], %s759
        %s761 = sand.u32 %s119, 1
        %s762 = smul.addr %s761, 32
        %s763 = scalar_lea.vmem [#allocation8], %s762
        %s764 = sand.u32 %s27, 1
        %s765 = scalar_lea.sflag [#allocation10], %s764
        %s766 = sand.u32 %s147, 1
        %s767 = smul.addr %s766, 2
        %s768 = scalar_lea.vmem [#allocation9], %s767
        %s769 = sand.u32 %s27, 1
        %s770 = scalar_lea.sflag [#allocation10], %s769
        %s771 = sand.u32 %s175, 1
        %s772 = scalar_lea.vmem [#allocation11], %s771
        // Predicated region
        $region45: #{tpu_custom_call.1} parent=31 // pred_check
          %p773 = pneg %p129
        $region46: #{tpu_custom_call.1} parent=31 // pred_check_branch
          %775 = sbr.rel (%p773) target = $region48
        $region47: #{tpu_custom_call.1} parent=31 // pred_region
          %s776 = smul.u32 2, %s32
          %s778 = ssub.s32 512, 512
          %779 = vsyncadd %s760, %s778
          %s780 = smul.addr %s31, 4
          %s781 = sadd.s32 %s776, %s780
          %s782 = smul.addr %s781, 128
          %s783 = scalar_lea.hbm %s3, %s782
          %s784 = sshll.u32 %s763, 4
          %s785 = int_to_ptr.vmem [resolvable:$true] %s784
          %790 = dma.vmem_to_hbm [thread:$0]  %s785, 512, %s783, %s760, 256, 256, 16
        $region48: #{tpu_custom_call.1} parent=31 // pred_fallthru
          _
        // Predicated region
        $region49: #{tpu_custom_call.1} parent=31 // pred_check
          %p791 = pneg %p157
        $region50: #{tpu_custom_call.1} parent=31 // pred_check_branch
          %793 = sbr.rel (%p791) target = $region52
        $region51: #{tpu_custom_call.1} parent=31 // pred_region
          %s794 = smul.u32 2, %s32
          %s796 = ssub.s32 32, 32
          %797 = vsyncadd %s765, %s796
          %s798 = smul.addr %s31, 2
          %s799 = sadd.s32 %s794, %s798
          %s800 = smul.addr %s799, 16
          %s801 = scalar_lea.hbm %s4, %s800
          %s803 = sshll.u32 %s768, 4
          %s804 = int_to_ptr.vmem [resolvable:$true] %s803
          %806 = dma.vmem_to_hbm [thread:$0]  %s804, 32, %s801, %s765
        $region52: #{tpu_custom_call.1} parent=31 // pred_fallthru
          _
        // Predicated region
        $region53: #{tpu_custom_call.1} parent=31 // pred_check
          %p807 = pneg %p185
        $region54: #{tpu_custom_call.1} parent=31 // pred_check_branch
          %809 = sbr.rel (%p807) target = $region56
        $region55: #{tpu_custom_call.1} parent=31 // pred_region
          %s811 = ssub.s32 16, 16
          %812 = vsyncadd %s770, %s811
          %s813 = sadd.s32 %s32, %s31
          %s814 = smul.addr %s813, 16
          %s815 = scalar_lea.hbm %s5, %s814
          %s817 = sshll.u32 %s772, 4
          %s818 = int_to_ptr.vmem [resolvable:$true] %s817
          %820 = dma.vmem_to_hbm [thread:$0]  %s818, 16, %s815, %s770
        $region56: #{tpu_custom_call.1} parent=31 // pred_fallthru
          _
      $region32: #{tpu_custom_call.1} parent=5 // pred_fallthru
        _
      %p821 = scmp.le.s32.totalorder 2, %s22
      // Predicated region
      $region57: #{tpu_custom_call.1} parent=5 // pred_check
        %p822 = pneg %p821
      $region58: #{tpu_custom_call.1} parent=5 // pred_check_branch
        %824 = sbr.rel (%p822) target = $region60
      $region59: #{tpu_custom_call.1} parent=5 // pred_region
        %s825 = ssub.s32 %s22, 2
        // Predicated region
        $region61: #{tpu_custom_call.1} parent=59 // pred_check
          %p826 = pneg %p135
        $region62: #{tpu_custom_call.1} parent=59 // pred_check_branch
          %828 = sbr.rel (%p826) target = $region64
        $region63: #{tpu_custom_call.1} parent=59 // pred_region
          %s829 = sand.u32 %s120, 1
          %s830 = scalar_lea.sflag [#allocation4], %s829
          %s831 = sand.u32 %s120, 1
          %s832 = smul.addr %s831, 32
          %s833 = scalar_lea.vmem [#allocation8], %s832
          %834 = dma.done %s830, 512
        $region64: #{tpu_custom_call.1} parent=59 // pred_fallthru
          _
        // Predicated region
        $region65: #{tpu_custom_call.1} parent=59 // pred_check
          %p835 = pneg %p163
        $region66: #{tpu_custom_call.1} parent=59 // pred_check_branch
          %837 = sbr.rel (%p835) target = $region68
        $region67: #{tpu_custom_call.1} parent=59 // pred_region
          %s838 = sand.u32 %s28, 1
          %s839 = scalar_lea.sflag [#allocation10], %s838
          %s840 = sand.u32 %s148, 1
          %s841 = smul.addr %s840, 2
          %s842 = scalar_lea.vmem [#allocation9], %s841
          %843 = dma.done %s839, 32
        $region68: #{tpu_custom_call.1} parent=59 // pred_fallthru
          _
        // Predicated region
        $region69: #{tpu_custom_call.1} parent=59 // pred_check
          %p844 = pneg %p191
        $region70: #{tpu_custom_call.1} parent=59 // pred_check_branch
          %846 = sbr.rel (%p844) target = $region72
        $region71: #{tpu_custom_call.1} parent=59 // pred_region
          %s847 = sand.u32 %s28, 1
          %s848 = scalar_lea.sflag [#allocation10], %s847
          %s849 = sand.u32 %s176, 1
          %s850 = scalar_lea.vmem [#allocation11], %s849
          %851 = dma.done %s848, 16
        $region72: #{tpu_custom_call.1} parent=59 // pred_fallthru
          _
      $region60: #{tpu_custom_call.1} parent=5 // pred_fallthru
        _
    $region6: #{tpu_custom_call.1} parent=1 // loop_footer
      %s26 = sadd.s32 1, %s22
    $region7: #{tpu_custom_call.1} parent=1 // loop_footer_branch
      %21 = sbr.rel target = $region3
    $region8: #{tpu_custom_call.1} parent=1 // loop_exit
      _
    %852 = vsyncpa [#allocation3], 1
    %s853 = scalar_lea.sflag [#allocation3], 1
    %854 = vsyncpa %s853, 1
    %855 = vsyncpa [#allocation6], 1
    %856 = vsyncpa [#allocation4], 1
    %s857 = scalar_lea.sflag [#allocation4], 1
    %858 = vsyncpa %s857, 1
    %859 = vsyncpa [#allocation10], 1
    %s860 = scalar_lea.sflag [#allocation10], 1
    %861 = vsyncpa %s860, 1

</llo_original>
